<compile_context>
chip_gen: v7x
topology: tpu7x:2x2x1
jax: 0.10.0
libtpu: 0.0.40
codegen_flags: <defaults>
</compile_context>

<pallas_src>
import functools

import jax
import jax.numpy as jnp
from jax.experimental import pallas as pl
from jax.experimental.pallas import tpu as pltpu

LANE = 128
SUBLANE = 8


def _round_up(v, m):
    return ((v + m - 1) // m) * m


def _pad2(a, rows, cols):
    r, c = a.shape
    return jnp.pad(a, ((0, rows - r), (0, cols - c)))


def dynamicnet_kernel(x_ref, w_in_ref, b_in_ref, w_mid_ref, b_mid_ref,
                      w_out_ref, b_out_ref, o_ref, *, n_h):
    x = x_ref[...]

    # Input layer + tanh. Weights are already [in, out]; MXU accumulates in f32.
    h = jnp.tanh(
        jnp.dot(x, w_in_ref[...], preferred_element_type=jnp.float32)
        + b_in_ref[...]
    )

    # Hoist loop-invariant work: load w_mid once, pre-broadcast b_mid once.
    w_mid = w_mid_ref[...]
    b_mid = jnp.broadcast_to(b_mid_ref[...], h.shape)

    # n_h is a static Python int -> fully unrolled so the LLO scheduler can
    # interleave matmul k+1 with the tanh (EUP) drain of layer k.
    for _ in range(n_h):
        h = jnp.tanh(
            jnp.dot(h, w_mid, preferred_element_type=jnp.float32) + b_mid
        )

    # Output layer + tanh; lane-dense (padded-to-128) store, slicing happens
    # outside the kernel.
    o_ref[...] = jnp.tanh(
        jnp.dot(h, w_out_ref[...], preferred_element_type=jnp.float32)
        + b_out_ref[...]
    ).astype(o_ref.dtype)


def dynamicnet_forward(x, w_in, b_in, w_mid, b_mid, w_out, b_out,
                       *, n_h, tile_n=512):
    """x: [N, D_in]; weights are PyTorch-style [out_features, in_features]."""
    N, D_in = x.shape
    D_H = w_in.shape[0]
    D_out = w_out.shape[0]

    # Lane-dense padded feature dims.
    dp_in = _round_up(D_in, LANE)
    dp_h = _round_up(D_H, LANE)
    dp_out = _round_up(D_out, LANE)

    # Batch tiling: one tile for small N, >=512-row tiles when N grows.
    # TODO(synk): for v7x, size tile_n against the 64 MiB VMEM (roughly half a
    # v6e-sized tile) if this net is ever run at large batch.
    tn = min(_round_up(N, SUBLANE), _round_up(tile_n, SUBLANE))
    n_pad = _round_up(N, tn)

    f32 = jnp.float32
    x_p = _pad2(x.astype(f32), n_pad, dp_in)
    # Pre-transpose to [in, out] and zero-pad: padded lanes are multiplied by
    # zero weights and get zero bias, so they stay exactly tanh(0) = 0.
    w_in_p = _pad2(w_in.astype(f32).T, dp_in, dp_h)
    w_mid_p = _pad2(w_mid.astype(f32).T, dp_h, dp_h)
    w_out_p = _pad2(w_out.astype(f32).T, dp_h, dp_out)
    b_in_p = _pad2(b_in.astype(f32).reshape(1, -1), 1, dp_h)
    b_mid_p = _pad2(b_mid.astype(f32).reshape(1, -1), 1, dp_h)
    b_out_p = _pad2(b_out.astype(f32).reshape(1, -1), 1, dp_out)

    grid = (n_pad // tn,)
    out = pl.pallas_call(
        functools.partial(dynamicnet_kernel, n_h=n_h),
        out_shape=jax.ShapeDtypeStruct((n_pad, dp_out), f32),
        grid=grid,
        in_specs=[
            pl.BlockSpec((tn, dp_in), lambda i: (i, 0)),     # x tile
            pl.BlockSpec((dp_in, dp_h), lambda i: (0, 0)),   # w_in (resident)
            pl.BlockSpec((1, dp_h), lambda i: (0, 0)),       # b_in
            pl.BlockSpec((dp_h, dp_h), lambda i: (0, 0)),    # w_mid
            pl.BlockSpec((1, dp_h), lambda i: (0, 0)),       # b_mid
            pl.BlockSpec((dp_h, dp_out), lambda i: (0, 0)),  # w_out
            pl.BlockSpec((1, dp_out), lambda i: (0, 0)),     # b_out
        ],
        out_specs=pl.BlockSpec((tn, dp_out), lambda i: (i, 0)),
        compiler_params=pltpu.CompilerParams(
            dimension_semantics=("parallel",)),
    )(x_p, w_in_p, b_in_p, w_mid_p, b_mid_p, w_out_p, b_out_p)

    return out[:N, :D_out]


def reference_forward(x, w_in, b_in, w_mid, b_mid, w_out, b_out, *, n_h):
    h = jnp.tanh(x @ w_in.T + b_in)
    for _ in range(n_h):
        h = jnp.tanh(h @ w_mid.T + b_mid)
    return jnp.tanh(h @ w_out.T + b_out)


if __name__ == "__main__":
    # Small shapes consistent with the module: N samples, D_in -> D_H -> D_out
    N, D_in, D_H, N_H, D_out = 8, 32, 32, 3, 8

    key = jax.random.PRNGKey(0)
    kx, k1, k2, k3, k4, k5, k6 = jax.random.split(key, 7)

    x = jax.random.normal(kx, (N, D_in), dtype=jnp.float32)

    # Deterministic parameter init (scaled normals; shapes match torch.nn.Linear)
    w_in = jax.random.normal(k1, (D_H, D_in), dtype=jnp.float32) * 0.1
    b_in = jax.random.normal(k2, (1, D_H), dtype=jnp.float32) * 0.1
    w_mid = jax.random.normal(k3, (D_H, D_H), dtype=jnp.float32) * 0.1
    b_mid = jax.random.normal(k4, (1, D_H), dtype=jnp.float32) * 0.1
    w_out = jax.random.normal(k5, (D_out, D_H), dtype=jnp.float32) * 0.1
    b_out = jax.random.normal(k6, (1, D_out), dtype=jnp.float32) * 0.1

    y = dynamicnet_forward(x, w_in, b_in, w_mid, b_mid, w_out, b_out, n_h=N_H)
    y = jax.block_until_ready(y)

    y_ref = reference_forward(x, w_in, b_in, w_mid, b_mid, w_out, b_out, n_h=N_H)
    assert y.shape == (N, D_out)
    assert jnp.allclose(y, y_ref, atol=1e-5, rtol=1e-5)

    print("KERNEL_OK")
</pallas_src>

<mosaic_0001>
module attributes {stable_mosaic.version = 11 : i64} {
  func.func @dynamicnet_kernel(%arg0: i32, %arg1: memref<8x128xf32, #tpu.memory_space<vmem>>, %arg2: memref<128x128xf32, #tpu.memory_space<vmem>>, %arg3: memref<1x128xf32, #tpu.memory_space<vmem>>, %arg4: memref<128x128xf32, #tpu.memory_space<vmem>>, %arg5: memref<1x128xf32, #tpu.memory_space<vmem>>, %arg6: memref<128x128xf32, #tpu.memory_space<vmem>>, %arg7: memref<1x128xf32, #tpu.memory_space<vmem>>, %arg8: memref<8x128xf32, #tpu.memory_space<vmem>>) attributes {dimension_semantics = [#tpu.dimension_semantics<parallel>], iteration_bounds = array<i64: 1>, scalar_prefetch = 0 : i64, scratch_operands = 0 : i64, tpu.core_type = #tpu.core_type<tc>, window_params = [{transform_indices = @transform_0, window_bounds = array<i64: 8, 128>}, {pipeline_mode = #tpu.pipeline_mode<synchronous>, transform_indices = @transform_1, window_bounds = array<i64: 128, 128>}, {pipeline_mode = #tpu.pipeline_mode<synchronous>, transform_indices = @transform_2, window_bounds = array<i64: 1, 128>}, {pipeline_mode = #tpu.pipeline_mode<synchronous>, transform_indices = @transform_3, window_bounds = array<i64: 128, 128>}, {pipeline_mode = #tpu.pipeline_mode<synchronous>, transform_indices = @transform_4, window_bounds = array<i64: 1, 128>}, {pipeline_mode = #tpu.pipeline_mode<synchronous>, transform_indices = @transform_5, window_bounds = array<i64: 128, 128>}, {pipeline_mode = #tpu.pipeline_mode<synchronous>, transform_indices = @transform_6, window_bounds = array<i64: 1, 128>}, {transform_indices = @transform_7, window_bounds = array<i64: 8, 128>}]} {
    %c0 = arith.constant 0 : index
    %c0_0 = arith.constant 0 : index
    %0 = vector.load %arg1[%c0, %c0_0] : memref<8x128xf32, #tpu.memory_space<vmem>>, vector<8x128xf32>
    %c0_1 = arith.constant 0 : index
    %c0_2 = arith.constant 0 : index
    %1 = vector.load %arg2[%c0_1, %c0_2] : memref<128x128xf32, #tpu.memory_space<vmem>>, vector<128x128xf32>
    %cst = arith.constant dense<0.000000e+00> : vector<8x128xf32>
    %2 = tpu.matmul %0, %1, %cst {dimension_numbers = #tpu.dot_dimension_numbers<[1], [0], [0], [1], [0, 0, 1, 1], [], []>} : vector<8x128xf32>, vector<128x128xf32>, vector<8x128xf32> -> vector<8x128xf32>
    %c0_3 = arith.constant 0 : index
    %c0_4 = arith.constant 0 : index
    %3 = vector.load %arg3[%c0_3, %c0_4] : memref<1x128xf32, #tpu.memory_space<vmem>>, vector<1x128xf32>
    %4 = vector.broadcast %3 : vector<1x128xf32> to vector<8x128xf32>
    %5 = arith.addf %2, %4 : vector<8x128xf32>
    %6 = math.tanh %5 : vector<8x128xf32>
    %c0_5 = arith.constant 0 : index
    %c0_6 = arith.constant 0 : index
    %7 = vector.load %arg4[%c0_5, %c0_6] : memref<128x128xf32, #tpu.memory_space<vmem>>, vector<128x128xf32>
    %c0_7 = arith.constant 0 : index
    %c0_8 = arith.constant 0 : index
    %8 = vector.load %arg5[%c0_7, %c0_8] : memref<1x128xf32, #tpu.memory_space<vmem>>, vector<1x128xf32>
    %9 = vector.shape_cast %8 : vector<1x128xf32> to vector<1x128xf32>
    %10 = vector.broadcast %9 : vector<1x128xf32> to vector<8x128xf32>
    %cst_9 = arith.constant dense<0.000000e+00> : vector<8x128xf32>
    %11 = tpu.matmul %6, %7, %cst_9 {dimension_numbers = #tpu.dot_dimension_numbers<[1], [0], [0], [1], [0, 0, 1, 1], [], []>} : vector<8x128xf32>, vector<128x128xf32>, vector<8x128xf32> -> vector<8x128xf32>
    %12 = arith.addf %11, %10 : vector<8x128xf32>
    %13 = math.tanh %12 : vector<8x128xf32>
    %cst_10 = arith.constant dense<0.000000e+00> : vector<8x128xf32>
    %14 = tpu.matmul %13, %7, %cst_10 {dimension_numbers = #tpu.dot_dimension_numbers<[1], [0], [0], [1], [0, 0, 1, 1], [], []>} : vector<8x128xf32>, vector<128x128xf32>, vector<8x128xf32> -> vector<8x128xf32>
    %15 = arith.addf %14, %10 : vector<8x128xf32>
    %16 = math.tanh %15 : vector<8x128xf32>
    %cst_11 = arith.constant dense<0.000000e+00> : vector<8x128xf32>
    %17 = tpu.matmul %16, %7, %cst_11 {dimension_numbers = #tpu.dot_dimension_numbers<[1], [0], [0], [1], [0, 0, 1, 1], [], []>} : vector<8x128xf32>, vector<128x128xf32>, vector<8x128xf32> -> vector<8x128xf32>
    %18 = arith.addf %17, %10 : vector<8x128xf32>
    %19 = math.tanh %18 : vector<8x128xf32>
    %c0_12 = arith.constant 0 : index
    %c0_13 = arith.constant 0 : index
    %20 = vector.load %arg6[%c0_12, %c0_13] : memref<128x128xf32, #tpu.memory_space<vmem>>, vector<128x128xf32>
    %cst_14 = arith.constant dense<0.000000e+00> : vector<8x128xf32>
    %21 = tpu.matmul %19, %20, %cst_14 {dimension_numbers = #tpu.dot_dimension_numbers<[1], [0], [0], [1], [0, 0, 1, 1], [], []>} : vector<8x128xf32>, vector<128x128xf32>, vector<8x128xf32> -> vector<8x128xf32>
    %c0_15 = arith.constant 0 : index
    %c0_16 = arith.constant 0 : index
    %22 = vector.load %arg7[%c0_15, %c0_16] : memref<1x128xf32, #tpu.memory_space<vmem>>, vector<1x128xf32>
    %23 = vector.broadcast %22 : vector<1x128xf32> to vector<8x128xf32>
    %24 = arith.addf %21, %23 : vector<8x128xf32>
    %25 = math.tanh %24 : vector<8x128xf32>
    %c0_17 = arith.constant 0 : index
    %c0_18 = arith.constant 0 : index
    %26 = vector.load %arg8[%c0_17, %c0_18] : memref<8x128xf32, #tpu.memory_space<vmem>>, vector<8x128xf32>
    tpu.vector_store %arg8[%c0_17, %c0_18], %25 {strides = array<i32>} : memref<8x128xf32, #tpu.memory_space<vmem>>, vector<8x128xf32>,
    return
  }
  func.func @transform_0(%arg0: i32) -> (i32, i32) {
    %c0_i32 = arith.constant 0 : i32
    %c0_i32_0 = arith.constant 0 : i32
    return %arg0, %c0_i32 : i32, i32
  }
  func.func @transform_1(%arg0: i32) -> (i32, i32) {
    %c0_i32 = arith.constant 0 : i32
    %c0_i32_0 = arith.constant 0 : i32
    %c0_i32_1 = arith.constant 0 : i32
    return %c0_i32, %c0_i32_0 : i32, i32
  }
  func.func @transform_2(%arg0: i32) -> (i32, i32) {
    %c0_i32 = arith.constant 0 : i32
    %c0_i32_0 = arith.constant 0 : i32
    %c0_i32_1 = arith.constant 0 : i32
    return %c0_i32, %c0_i32_0 : i32, i32
  }
  func.func @transform_3(%arg0: i32) -> (i32, i32) {
    %c0_i32 = arith.constant 0 : i32
    %c0_i32_0 = arith.constant 0 : i32
    %c0_i32_1 = arith.constant 0 : i32
    return %c0_i32, %c0_i32_0 : i32, i32
  }
  func.func @transform_4(%arg0: i32) -> (i32, i32) {
    %c0_i32 = arith.constant 0 : i32
    %c0_i32_0 = arith.constant 0 : i32
    %c0_i32_1 = arith.constant 0 : i32
    return %c0_i32, %c0_i32_0 : i32, i32
  }
  func.func @transform_5(%arg0: i32) -> (i32, i32) {
    %c0_i32 = arith.constant 0 : i32
    %c0_i32_0 = arith.constant 0 : i32
    %c0_i32_1 = arith.constant 0 : i32
    return %c0_i32, %c0_i32_0 : i32, i32
  }
  func.func @transform_6(%arg0: i32) -> (i32, i32) {
    %c0_i32 = arith.constant 0 : i32
    %c0_i32_0 = arith.constant 0 : i32
    %c0_i32_1 = arith.constant 0 : i32
    return %c0_i32, %c0_i32_0 : i32, i32
  }
  func.func @transform_7(%arg0: i32) -> (i32, i32) {
    %c0_i32 = arith.constant 0 : i32
    %c0_i32_0 = arith.constant 0 : i32
    return %arg0, %c0_i32 : i32, i32
  }
}

</mosaic_0001>

<llo_original>
// kernel: tpu_custom_call.1
$region0: #{tpu_custom_call.1}
  #allocation0 [shape = 'u32[]', space=smem, size = 0x4, offset = 0x4, fixed_abs, tag = 'smem constant byte address 0x4 - core index']
  #allocation1 [shape = 'u32[144,128]{1,0:T(1,128)}', space=vmem, size = 0x12000, scoped, tag = 'internal scratch']
  %s0 = inlined_call_operand.hbm [shape: f32[8,128], index: 0, kind: input, shape index: {}]
  %s1 = inlined_call_operand.hbm [shape: f32[128,128], index: 1, kind: input, shape index: {}]
  %s2 = inlined_call_operand.vmem [shape: f32[1,128], index: 2, kind: input, shape index: {}]
  %s3 = inlined_call_operand.hbm [shape: f32[128,128], index: 3, kind: input, shape index: {}]
  %s4 = inlined_call_operand.vmem [shape: f32[1,128], index: 4, kind: input, shape index: {}]
  %s5 = inlined_call_operand.hbm [shape: f32[128,128], index: 5, kind: input, shape index: {}]
  %s6 = inlined_call_operand.vmem [shape: f32[1,128], index: 6, kind: input, shape index: {}]
  %s7 = inlined_call_operand.hbm [shape: f32[8,128], index: 7, kind: output, shape index: {}]
  %s8 = sld [smem:[#allocation0]]
  $region54: #{tpu_custom_call.1} parent=0
    _
  %s10 = ssub.s32 1, %s8
  %s11 = scalar_select 0, %s10, %s8
  $region1: #{tpu_custom_call.1} parent=0
    #allocation2 [shape = 'u8[4096]{0}', space=vmem, size = 0x1000, scoped, tag = 'input window, operand 0, single buffered']
    #allocation3 [shape = 's32[1]{0}', space=sflag, size = 0x4, scoped, tag = 'scoped memory for tpu_custom_call.1']
    #allocation4 [shape = 's32[1]{0}', space=sflag, size = 0x4, scoped, tag = 'scoped memory for tpu_custom_call.1']
    #allocation5 [shape = 'u8[65536]{0}', space=vmem, size = 0x10000, scoped, tag = 'input window, operand 1, single buffered']
    #allocation6 [shape = 's32[1]{0}', space=sflag, size = 0x4, scoped, tag = 'scoped memory for tpu_custom_call.1']
    #allocation7 [shape = 'u8[65536]{0}', space=vmem, size = 0x10000, scoped, tag = 'input window, operand 3, single buffered']
    #allocation8 [shape = 'u8[65536]{0}', space=vmem, size = 0x10000, scoped, tag = 'input window, operand 5, single buffered']
    #allocation9 [shape = 's32[1]{0}', space=sflag, size = 0x4, scoped, tag = 'scoped memory for tpu_custom_call.1']
    #allocation10 [shape = 'u8[4096]{0}', space=vmem, size = 0x1000, scoped, tag = 'output window, operand 0, single buffered']
    %12 = vsyncpa [#allocation3], 0
    %13 = vsyncpa [#allocation6], 0
    %14 = vsyncpa [#allocation9], 0
    %15 = vsyncpa [#allocation4], 0
    // Predicated region
    $region2: #{tpu_custom_call.1} parent=1 // pred_check
      _
    $region3: #{tpu_custom_call.1} parent=1 // pred_check_branch
      %17 = sbr.rel (0) target = $region5
    $region4: #{tpu_custom_call.1} parent=1 // pred_region
      %s19 = ssub.s32 128, 128
      %20 = vsyncadd [#allocation3], %s19
      %s22 = sshll.u32 [#allocation2], 4
      %s23 = int_to_ptr.vmem [resolvable:$true] %s22
      %25 = dma.hbm_to_vmem [thread:$0]  %s0, 128, %s23, [#allocation3]
    $region5: #{tpu_custom_call.1} parent=1 // pred_fallthru
      _
    // Predicated region
    $region6: #{tpu_custom_call.1} parent=1 // pred_check
      _
    $region7: #{tpu_custom_call.1} parent=1 // pred_check_branch
      %27 = sbr.rel (0) target = $region9
    $region8: #{tpu_custom_call.1} parent=1 // pred_region
      %s29 = ssub.s32 2048, 2048
      %30 = vsyncadd [#allocation6], %s29
      %s31 = sshll.u32 [#allocation5], 4
      %s32 = int_to_ptr.vmem [resolvable:$true] %s31
      %37 = dma.hbm_to_vmem [thread:$0]  %s1, 2048, %s32, [#allocation6], 128, 128, 8
    $region9: #{tpu_custom_call.1} parent=1 // pred_fallthru
      _
    // Predicated region
    $region10: #{tpu_custom_call.1} parent=1 // pred_check
      _
    $region11: #{tpu_custom_call.1} parent=1 // pred_check_branch
      %39 = sbr.rel (0) target = $region13
    $region12: #{tpu_custom_call.1} parent=1 // pred_region
      _
    $region13: #{tpu_custom_call.1} parent=1 // pred_fallthru
      _
    // Predicated region
    $region14: #{tpu_custom_call.1} parent=1 // pred_check
      _
    $region15: #{tpu_custom_call.1} parent=1 // pred_check_branch
      %41 = sbr.rel (0) target = $region17
    $region16: #{tpu_custom_call.1} parent=1 // pred_region
      %s43 = ssub.s32 2048, 2048
      %44 = vsyncadd [#allocation6], %s43
      %s45 = sshll.u32 [#allocation7], 4
      %s46 = int_to_ptr.vmem [resolvable:$true] %s45
      %51 = dma.hbm_to_vmem [thread:$0]  %s3, 2048, %s46, [#allocation6], 128, 128, 8
    $region17: #{tpu_custom_call.1} parent=1 // pred_fallthru
      _
    // Predicated region
    $region18: #{tpu_custom_call.1} parent=1 // pred_check
      _
    $region19: #{tpu_custom_call.1} parent=1 // pred_check_branch
      %53 = sbr.rel (0) target = $region21
    $region20: #{tpu_custom_call.1} parent=1 // pred_region
      _
    $region21: #{tpu_custom_call.1} parent=1 // pred_fallthru
      _
    // Predicated region
    $region22: #{tpu_custom_call.1} parent=1 // pred_check
      _
    $region23: #{tpu_custom_call.1} parent=1 // pred_check_branch
      %55 = sbr.rel (0) target = $region25
    $region24: #{tpu_custom_call.1} parent=1 // pred_region
      %s57 = ssub.s32 2048, 2048
      %58 = vsyncadd [#allocation9], %s57
      %s59 = sshll.u32 [#allocation8], 4
      %s60 = int_to_ptr.vmem [resolvable:$true] %s59
      %65 = dma.hbm_to_vmem [thread:$0]  %s5, 2048, %s60, [#allocation9], 128, 128, 8
    $region25: #{tpu_custom_call.1} parent=1 // pred_fallthru
      _
    // Predicated region
    $region26: #{tpu_custom_call.1} parent=1 // pred_check
      _
    $region27: #{tpu_custom_call.1} parent=1 // pred_check_branch
      %67 = sbr.rel (0) target = $region29
    $region28: #{tpu_custom_call.1} parent=1 // pred_region
      _
    $region29: #{tpu_custom_call.1} parent=1 // pred_fallthru
      _
    // Predicated region
    $region30: #{tpu_custom_call.1} parent=1 // pred_check
      _
    $region31: #{tpu_custom_call.1} parent=1 // pred_check_branch
      %69 = sbr.rel (0) target = $region33
    $region32: #{tpu_custom_call.1} parent=1 // pred_region
      %70 = dma.done [#allocation3], 128
    $region33: #{tpu_custom_call.1} parent=1 // pred_fallthru
      _
    // Predicated region
    $region34: #{tpu_custom_call.1} parent=1 // pred_check
      _
    $region35: #{tpu_custom_call.1} parent=1 // pred_check_branch
      %72 = sbr.rel (0) target = $region37
    $region36: #{tpu_custom_call.1} parent=1 // pred_region
      %73 = dma.done [#allocation6], 2048
    $region37: #{tpu_custom_call.1} parent=1 // pred_fallthru
      _
    // Predicated region
    $region38: #{tpu_custom_call.1} parent=1 // pred_check
      _
    $region39: #{tpu_custom_call.1} parent=1 // pred_check_branch
      %75 = sbr.rel (0) target = $region41
    $region40: #{tpu_custom_call.1} parent=1 // pred_region
      %76 = dma.done [#allocation6], 2048
    $region41: #{tpu_custom_call.1} parent=1 // pred_fallthru
      _
    // Predicated region
    $region42: #{tpu_custom_call.1} parent=1 // pred_check
      _
    $region43: #{tpu_custom_call.1} parent=1 // pred_check_branch
      %78 = sbr.rel (0) target = $region45
    $region44: #{tpu_custom_call.1} parent=1 // pred_region
      %79 = dma.done [#allocation9], 2048
    $region45: #{tpu_custom_call.1} parent=1 // pred_fallthru
      _
    %v80 = vld [vmem:[#allocation2] sm:$0xff]
    %v81 = vld [vmem:[#allocation5] sm:$0xff]
    %v82 = vld [vmem:[#allocation5 + $0x8] sm:$0xff]
    %v83 = vld [vmem:[#allocation5 + $0x10] sm:$0xff]
    %v84 = vld [vmem:[#allocation5 + $0x18] sm:$0xff]
    %v85 = vld [vmem:[#allocation5 + $0x20] sm:$0xff]
    %v86 = vld [vmem:[#allocation5 + $0x28] sm:$0xff]
    %v87 = vld [vmem:[#allocation5 + $0x30] sm:$0xff]
    %v88 = vld [vmem:[#allocation5 + $0x38] sm:$0xff]
    %v89 = vld [vmem:[#allocation5 + $0x40] sm:$0xff]
    %v90 = vld [vmem:[#allocation5 + $0x48] sm:$0xff]
    %v91 = vld [vmem:[#allocation5 + $0x50] sm:$0xff]
    %v92 = vld [vmem:[#allocation5 + $0x58] sm:$0xff]
    %v93 = vld [vmem:[#allocation5 + $0x60] sm:$0xff]
    %v94 = vld [vmem:[#allocation5 + $0x68] sm:$0xff]
    %v95 = vld [vmem:[#allocation5 + $0x70] sm:$0xff]
    %v96 = vld [vmem:[#allocation5 + $0x78] sm:$0xff]
    %v97 = vld [vmem:[%s2] sm:$0x1]
    %v99 = vlaneseq
    %v100 = vshrl.u32 %v99, 7
    %v101 = vsub.s32 0, %v100
    %v102 = vrot.slane %v97, %v101
    %104 = vmatprep.subr.mxu0 0.0
    %105 = vmatpush1.msra.mxu0 %v81
    %106 = vmatprep.subr.mxu0 0.0
    %107 = vmatpush1.msra.mxu0 %v82
    %108 = vmatprep.subr.mxu0 0.0
    %109 = vmatpush1.msra.mxu0 %v83
    %110 = vmatprep.subr.mxu0 0.0
    %111 = vmatpush1.msra.mxu0 %v84
    %112 = vmatprep.subr.mxu0 0.0
    %113 = vmatpush1.msra.mxu0 %v85
    %114 = vmatprep.subr.mxu0 0.0
    %115 = vmatpush1.msra.mxu0 %v86
    %116 = vmatprep.subr.mxu0 0.0
    %117 = vmatpush1.msra.mxu0 %v87
    %118 = vmatprep.subr.mxu0 0.0
    %119 = vmatpush1.msra.mxu0 %v88
    %120 = vmatprep.subr.mxu0 0.0
    %121 = vmatpush1.msra.mxu0 %v89
    %122 = vmatprep.subr.mxu0 0.0
    %123 = vmatpush1.msra.mxu0 %v90
    %124 = vmatprep.subr.mxu0 0.0
    %125 = vmatpush1.msra.mxu0 %v91
    %126 = vmatprep.subr.mxu0 0.0
    %127 = vmatpush1.msra.mxu0 %v92
    %128 = vmatprep.subr.mxu0 0.0
    %129 = vmatpush1.msra.mxu0 %v93
    %130 = vmatprep.subr.mxu0 0.0
    %131 = vmatpush1.msra.mxu0 %v94
    %132 = vmatprep.subr.mxu0 0.0
    %133 = vmatpush1.msra.mxu0 %v95
    %134 = vmatprep.subr.mxu0 0.0
    %135 = vmatpush1.msra.mxu0 %v96
    %136 = vmatprep.subr.mxu0 0.0
    %137 = vmatpush1.msra.mxu0 0.0
    %138 = vmatprep.subr.mxu0 0.0
    %139 = vmatpush1.msra.mxu0 0.0
    %140 = vmatprep.subr.mxu0 0.0
    %141 = vmatpush1.msra.mxu0 0.0
    %142 = vmatprep.subr.mxu0 0.0
    %143 = vmatpush1.msra.mxu0 0.0
    %144 = vmatprep.subr.mxu0 0.0
    %145 = vmatpush1.msra.mxu0 0.0
    %146 = vmatprep.subr.mxu0 0.0
    %147 = vmatpush1.msra.mxu0 0.0
    %148 = vmatprep.subr.mxu0 0.0
    %149 = vmatpush1.msra.mxu0 0.0
    %150 = vmatprep.subr.mxu0 0.0
    %151 = vmatpush1.msra.mxu0 0.0
    %152 = vmatprep.subr.mxu0 0.0
    %153 = vmatpush1.msra.mxu0 0.0
    %154 = vmatprep.subr.mxu0 0.0
    %155 = vmatpush1.msra.mxu0 0.0
    %156 = vmatprep.subr.mxu0 0.0
    %157 = vmatpush1.msra.mxu0 0.0
    %158 = vmatprep.subr.mxu0 0.0
    %159 = vmatpush1.msra.mxu0 0.0
    %160 = vmatprep.subr.mxu0 0.0
    %161 = vmatpush1.msra.mxu0 0.0
    %162 = vmatprep.subr.mxu0 0.0
    %163 = vmatpush1.msra.mxu0 0.0
    %164 = vmatprep.subr.mxu0 0.0
    %165 = vmatpush1.msra.mxu0 0.0
    %166 = vmatprep.subr.mxu0 0.0
    %167 = vmatpush1.msra.mxu0 0.0
    %168 = vmatprep.mubr.f32.mxu0 0.0
    %169 = vmatmul.mubr.f32.gmra.mrb[0].mxu0 %v80
    %v170 = vpop.f32.mrb[0].mxu0
    %v171 = vadd.f32 %v102, %v170
    %v172 = vpop.f32.mrb[0].mxu0
    %173 = vdwg.mxu0
    %v174 = vtanh.pop %v171
    %v175 = vld [vmem:[#allocation7] sm:$0xff]
    %v176 = vld [vmem:[#allocation7 + $0x8] sm:$0xff]
    %v177 = vld [vmem:[#allocation7 + $0x10] sm:$0xff]
    %v178 = vld [vmem:[#allocation7 + $0x18] sm:$0xff]
    %v179 = vld [vmem:[#allocation7 + $0x20] sm:$0xff]
    %v180 = vld [vmem:[#allocation7 + $0x28] sm:$0xff]
    %v181 = vld [vmem:[#allocation7 + $0x30] sm:$0xff]
    %v182 = vld [vmem:[#allocation7 + $0x38] sm:$0xff]
    %v183 = vld [vmem:[#allocation7 + $0x40] sm:$0xff]
    %v184 = vld [vmem:[#allocation7 + $0x48] sm:$0xff]
    %v185 = vld [vmem:[#allocation7 + $0x50] sm:$0xff]
    %v186 = vld [vmem:[#allocation7 + $0x58] sm:$0xff]
    %v187 = vld [vmem:[#allocation7 + $0x60] sm:$0xff]
    %v188 = vld [vmem:[#allocation7 + $0x68] sm:$0xff]
    %v189 = vld [vmem:[#allocation7 + $0x70] sm:$0xff]
    %v190 = vld [vmem:[#allocation7 + $0x78] sm:$0xff]
    %v191 = vld [vmem:[%s4] sm:$0x1]
    %v193 = vlaneseq
    %v194 = vshrl.u32 %v193, 7
    %v195 = vsub.s32 0, %v194
    %v196 = vrot.slane %v191, %v195
    %198 = vmatprep.subr.mxu0 0.0
    %199 = vmatpush1.msra.mxu0 %v175
    %200 = vmatprep.subr.mxu0 0.0
    %201 = vmatpush1.msra.mxu0 %v176
    %202 = vmatprep.subr.mxu0 0.0
    %203 = vmatpush1.msra.mxu0 %v177
    %204 = vmatprep.subr.mxu0 0.0
    %205 = vmatpush1.msra.mxu0 %v178
    %206 = vmatprep.subr.mxu0 0.0
    %207 = vmatpush1.msra.mxu0 %v179
    %208 = vmatprep.subr.mxu0 0.0
    %209 = vmatpush1.msra.mxu0 %v180
    %210 = vmatprep.subr.mxu0 0.0
    %211 = vmatpush1.msra.mxu0 %v181
    %212 = vmatprep.subr.mxu0 0.0
    %213 = vmatpush1.msra.mxu0 %v182
    %214 = vmatprep.subr.mxu0 0.0
    %215 = vmatpush1.msra.mxu0 %v183
    %216 = vmatprep.subr.mxu0 0.0
    %217 = vmatpush1.msra.mxu0 %v184
    %218 = vmatprep.subr.mxu0 0.0
    %219 = vmatpush1.msra.mxu0 %v185
    %220 = vmatprep.subr.mxu0 0.0
    %221 = vmatpush1.msra.mxu0 %v186
    %222 = vmatprep.subr.mxu0 0.0
    %223 = vmatpush1.msra.mxu0 %v187
    %224 = vmatprep.subr.mxu0 0.0
    %225 = vmatpush1.msra.mxu0 %v188
    %226 = vmatprep.subr.mxu0 0.0
    %227 = vmatpush1.msra.mxu0 %v189
    %228 = vmatprep.subr.mxu0 0.0
    %229 = vmatpush1.msra.mxu0 %v190
    %230 = vmatprep.subr.mxu0 0.0
    %231 = vmatpush1.msra.mxu0 0.0
    %232 = vmatprep.subr.mxu0 0.0
    %233 = vmatpush1.msra.mxu0 0.0
    %234 = vmatprep.subr.mxu0 0.0
    %235 = vmatpush1.msra.mxu0 0.0
    %236 = vmatprep.subr.mxu0 0.0
    %237 = vmatpush1.msra.mxu0 0.0
    %238 = vmatprep.subr.mxu0 0.0
    %239 = vmatpush1.msra.mxu0 0.0
    %240 = vmatprep.subr.mxu0 0.0
    %241 = vmatpush1.msra.mxu0 0.0
    %242 = vmatprep.subr.mxu0 0.0
    %243 = vmatpush1.msra.mxu0 0.0
    %244 = vmatprep.subr.mxu0 0.0
    %245 = vmatpush1.msra.mxu0 0.0
    %246 = vmatprep.subr.mxu0 0.0
    %247 = vmatpush1.msra.mxu0 0.0
    %248 = vmatprep.subr.mxu0 0.0
    %249 = vmatpush1.msra.mxu0 0.0
    %250 = vmatprep.subr.mxu0 0.0
    %251 = vmatpush1.msra.mxu0 0.0
    %252 = vmatprep.subr.mxu0 0.0
    %253 = vmatpush1.msra.mxu0 0.0
    %254 = vmatprep.subr.mxu0 0.0
    %255 = vmatpush1.msra.mxu0 0.0
    %256 = vmatprep.subr.mxu0 0.0
    %257 = vmatpush1.msra.mxu0 0.0
    %258 = vmatprep.subr.mxu0 0.0
    %259 = vmatpush1.msra.mxu0 0.0
    %260 = vmatprep.subr.mxu0 0.0
    %261 = vmatpush1.msra.mxu0 0.0
    %262 = vmatprep.mubr.f32.mxu0 0.0
    %263 = vmatmul.mubr.f32.gmra.mrb[0].mxu0 %v174
    %v264 = vpop.f32.mrb[0].mxu0
    %v265 = vadd.f32 %v196, %v264
    %v266 = vpop.f32.mrb[0].mxu0
    %267 = vdwg.mxu0
    %v268 = vtanh.pop %v265
    %269 = vmatprep.subr.mxu0 0.0
    %270 = vmatpush1.msra.mxu0 %v175
    %271 = vmatprep.subr.mxu0 0.0
    %272 = vmatpush1.msra.mxu0 %v176
    %273 = vmatprep.subr.mxu0 0.0
    %274 = vmatpush1.msra.mxu0 %v177
    %275 = vmatprep.subr.mxu0 0.0
    %276 = vmatpush1.msra.mxu0 %v178
    %277 = vmatprep.subr.mxu0 0.0
    %278 = vmatpush1.msra.mxu0 %v179
    %279 = vmatprep.subr.mxu0 0.0
    %280 = vmatpush1.msra.mxu0 %v180
    %281 = vmatprep.subr.mxu0 0.0
    %282 = vmatpush1.msra.mxu0 %v181
    %283 = vmatprep.subr.mxu0 0.0
    %284 = vmatpush1.msra.mxu0 %v182
    %285 = vmatprep.subr.mxu0 0.0
    %286 = vmatpush1.msra.mxu0 %v183
    %287 = vmatprep.subr.mxu0 0.0
    %288 = vmatpush1.msra.mxu0 %v184
    %289 = vmatprep.subr.mxu0 0.0
    %290 = vmatpush1.msra.mxu0 %v185
    %291 = vmatprep.subr.mxu0 0.0
    %292 = vmatpush1.msra.mxu0 %v186
    %293 = vmatprep.subr.mxu0 0.0
    %294 = vmatpush1.msra.mxu0 %v187
    %295 = vmatprep.subr.mxu0 0.0
    %296 = vmatpush1.msra.mxu0 %v188
    %297 = vmatprep.subr.mxu0 0.0
    %298 = vmatpush1.msra.mxu0 %v189
    %299 = vmatprep.subr.mxu0 0.0
    %300 = vmatpush1.msra.mxu0 %v190
    %301 = vmatprep.subr.mxu0 0.0
    %302 = vmatpush1.msra.mxu0 0.0
    %303 = vmatprep.subr.mxu0 0.0
    %304 = vmatpush1.msra.mxu0 0.0
    %305 = vmatprep.subr.mxu0 0.0
    %306 = vmatpush1.msra.mxu0 0.0
    %307 = vmatprep.subr.mxu0 0.0
    %308 = vmatpush1.msra.mxu0 0.0
    %309 = vmatprep.subr.mxu0 0.0
    %310 = vmatpush1.msra.mxu0 0.0
    %311 = vmatprep.subr.mxu0 0.0
    %312 = vmatpush1.msra.mxu0 0.0
    %313 = vmatprep.subr.mxu0 0.0
    %314 = vmatpush1.msra.mxu0 0.0
    %315 = vmatprep.subr.mxu0 0.0
    %316 = vmatpush1.msra.mxu0 0.0
    %317 = vmatprep.subr.mxu0 0.0
    %318 = vmatpush1.msra.mxu0 0.0
    %319 = vmatprep.subr.mxu0 0.0
    %320 = vmatpush1.msra.mxu0 0.0
    %321 = vmatprep.subr.mxu0 0.0
    %322 = vmatpush1.msra.mxu0 0.0
    %323 = vmatprep.subr.mxu0 0.0
    %324 = vmatpush1.msra.mxu0 0.0
    %325 = vmatprep.subr.mxu0 0.0
    %326 = vmatpush1.msra.mxu0 0.0
    %327 = vmatprep.subr.mxu0 0.0
    %328 = vmatpush1.msra.mxu0 0.0
    %329 = vmatprep.subr.mxu0 0.0
    %330 = vmatpush1.msra.mxu0 0.0
    %331 = vmatprep.subr.mxu0 0.0
    %332 = vmatpush1.msra.mxu0 0.0
    %333 = vmatprep.mubr.f32.mxu0 0.0
    %334 = vmatmul.mubr.f32.gmra.mrb[0].mxu0 %v268
    %v335 = vpop.f32.mrb[0].mxu0
    %v336 = vadd.f32 %v196, %v335
    %v337 = vpop.f32.mrb[0].mxu0
    %338 = vdwg.mxu0
    %v339 = vtanh.pop %v336
    %340 = vmatprep.subr.mxu0 0.0
    %341 = vmatpush1.msra.mxu0 %v175
    %342 = vmatprep.subr.mxu0 0.0
    %343 = vmatpush1.msra.mxu0 %v176
    %344 = vmatprep.subr.mxu0 0.0
    %345 = vmatpush1.msra.mxu0 %v177
    %346 = vmatprep.subr.mxu0 0.0
    %347 = vmatpush1.msra.mxu0 %v178
    %348 = vmatprep.subr.mxu0 0.0
    %349 = vmatpush1.msra.mxu0 %v179
    %350 = vmatprep.subr.mxu0 0.0
    %351 = vmatpush1.msra.mxu0 %v180
    %352 = vmatprep.subr.mxu0 0.0
    %353 = vmatpush1.msra.mxu0 %v181
    %354 = vmatprep.subr.mxu0 0.0
    %355 = vmatpush1.msra.mxu0 %v182
    %356 = vmatprep.subr.mxu0 0.0
    %357 = vmatpush1.msra.mxu0 %v183
    %358 = vmatprep.subr.mxu0 0.0
    %359 = vmatpush1.msra.mxu0 %v184
    %360 = vmatprep.subr.mxu0 0.0
    %361 = vmatpush1.msra.mxu0 %v185
    %362 = vmatprep.subr.mxu0 0.0
    %363 = vmatpush1.msra.mxu0 %v186
    %364 = vmatprep.subr.mxu0 0.0
    %365 = vmatpush1.msra.mxu0 %v187
    %366 = vmatprep.subr.mxu0 0.0
    %367 = vmatpush1.msra.mxu0 %v188
    %368 = vmatprep.subr.mxu0 0.0
    %369 = vmatpush1.msra.mxu0 %v189
    %370 = vmatprep.subr.mxu0 0.0
    %371 = vmatpush1.msra.mxu0 %v190
    %372 = vmatprep.subr.mxu0 0.0
    %373 = vmatpush1.msra.mxu0 0.0
    %374 = vmatprep.subr.mxu0 0.0
    %375 = vmatpush1.msra.mxu0 0.0
    %376 = vmatprep.subr.mxu0 0.0
    %377 = vmatpush1.msra.mxu0 0.0
    %378 = vmatprep.subr.mxu0 0.0
    %379 = vmatpush1.msra.mxu0 0.0
    %380 = vmatprep.subr.mxu0 0.0
    %381 = vmatpush1.msra.mxu0 0.0
    %382 = vmatprep.subr.mxu0 0.0
    %383 = vmatpush1.msra.mxu0 0.0
    %384 = vmatprep.subr.mxu0 0.0
    %385 = vmatpush1.msra.mxu0 0.0
    %386 = vmatprep.subr.mxu0 0.0
    %387 = vmatpush1.msra.mxu0 0.0
    %388 = vmatprep.subr.mxu0 0.0
    %389 = vmatpush1.msra.mxu0 0.0
    %390 = vmatprep.subr.mxu0 0.0
    %391 = vmatpush1.msra.mxu0 0.0
    %392 = vmatprep.subr.mxu0 0.0
    %393 = vmatpush1.msra.mxu0 0.0
    %394 = vmatprep.subr.mxu0 0.0
    %395 = vmatpush1.msra.mxu0 0.0
    %396 = vmatprep.subr.mxu0 0.0
    %397 = vmatpush1.msra.mxu0 0.0
    %398 = vmatprep.subr.mxu0 0.0
    %399 = vmatpush1.msra.mxu0 0.0
    %400 = vmatprep.subr.mxu0 0.0
    %401 = vmatpush1.msra.mxu0 0.0
    %402 = vmatprep.subr.mxu0 0.0
    %403 = vmatpush1.msra.mxu0 0.0
    %404 = vmatprep.mubr.f32.mxu0 0.0
    %405 = vmatmul.mubr.f32.gmra.mrb[0].mxu0 %v339
    %v406 = vpop.f32.mrb[0].mxu0
    %v407 = vadd.f32 %v196, %v406
    %v408 = vpop.f32.mrb[0].mxu0
    %409 = vdwg.mxu0
    %v410 = vtanh.pop %v407
    %v411 = vld [vmem:[#allocation8] sm:$0xff]
    %v412 = vld [vmem:[#allocation8 + $0x8] sm:$0xff]
    %v413 = vld [vmem:[#allocation8 + $0x10] sm:$0xff]
    %v414 = vld [vmem:[#allocation8 + $0x18] sm:$0xff]
    %v415 = vld [vmem:[#allocation8 + $0x20] sm:$0xff]
    %v416 = vld [vmem:[#allocation8 + $0x28] sm:$0xff]
    %v417 = vld [vmem:[#allocation8 + $0x30] sm:$0xff]
    %v418 = vld [vmem:[#allocation8 + $0x38] sm:$0xff]
    %v419 = vld [vmem:[#allocation8 + $0x40] sm:$0xff]
    %v420 = vld [vmem:[#allocation8 + $0x48] sm:$0xff]
    %v421 = vld [vmem:[#allocation8 + $0x50] sm:$0xff]
    %v422 = vld [vmem:[#allocation8 + $0x58] sm:$0xff]
    %v423 = vld [vmem:[#allocation8 + $0x60] sm:$0xff]
    %v424 = vld [vmem:[#allocation8 + $0x68] sm:$0xff]
    %v425 = vld [vmem:[#allocation8 + $0x70] sm:$0xff]
    %v426 = vld [vmem:[#allocation8 + $0x78] sm:$0xff]
    %v427 = vld [vmem:[%s6] sm:$0x1]
    %v429 = vlaneseq
    %v430 = vshrl.u32 %v429, 7
    %v431 = vsub.s32 0, %v430
    %v432 = vrot.slane %v427, %v431
    %434 = vmatprep.subr.mxu0 0.0
    %435 = vmatpush1.msra.mxu0 %v411
    %436 = vmatprep.subr.mxu0 0.0
    %437 = vmatpush1.msra.mxu0 %v412
    %438 = vmatprep.subr.mxu0 0.0
    %439 = vmatpush1.msra.mxu0 %v413
    %440 = vmatprep.subr.mxu0 0.0
    %441 = vmatpush1.msra.mxu0 %v414
    %442 = vmatprep.subr.mxu0 0.0
    %443 = vmatpush1.msra.mxu0 %v415
    %444 = vmatprep.subr.mxu0 0.0
    %445 = vmatpush1.msra.mxu0 %v416
    %446 = vmatprep.subr.mxu0 0.0
    %447 = vmatpush1.msra.mxu0 %v417
    %448 = vmatprep.subr.mxu0 0.0
    %449 = vmatpush1.msra.mxu0 %v418
    %450 = vmatprep.subr.mxu0 0.0
    %451 = vmatpush1.msra.mxu0 %v419
    %452 = vmatprep.subr.mxu0 0.0
    %453 = vmatpush1.msra.mxu0 %v420
    %454 = vmatprep.subr.mxu0 0.0
    %455 = vmatpush1.msra.mxu0 %v421
    %456 = vmatprep.subr.mxu0 0.0
    %457 = vmatpush1.msra.mxu0 %v422
    %458 = vmatprep.subr.mxu0 0.0
    %459 = vmatpush1.msra.mxu0 %v423
    %460 = vmatprep.subr.mxu0 0.0
    %461 = vmatpush1.msra.mxu0 %v424
    %462 = vmatprep.subr.mxu0 0.0
    %463 = vmatpush1.msra.mxu0 %v425
    %464 = vmatprep.subr.mxu0 0.0
    %465 = vmatpush1.msra.mxu0 %v426
    %466 = vmatprep.subr.mxu0 0.0
    %467 = vmatpush1.msra.mxu0 0.0
    %468 = vmatprep.subr.mxu0 0.0
    %469 = vmatpush1.msra.mxu0 0.0
    %470 = vmatprep.subr.mxu0 0.0
    %471 = vmatpush1.msra.mxu0 0.0
    %472 = vmatprep.subr.mxu0 0.0
    %473 = vmatpush1.msra.mxu0 0.0
    %474 = vmatprep.subr.mxu0 0.0
    %475 = vmatpush1.msra.mxu0 0.0
    %476 = vmatprep.subr.mxu0 0.0
    %477 = vmatpush1.msra.mxu0 0.0
    %478 = vmatprep.subr.mxu0 0.0
    %479 = vmatpush1.msra.mxu0 0.0
    %480 = vmatprep.subr.mxu0 0.0
    %481 = vmatpush1.msra.mxu0 0.0
    %482 = vmatprep.subr.mxu0 0.0
    %483 = vmatpush1.msra.mxu0 0.0
    %484 = vmatprep.subr.mxu0 0.0
    %485 = vmatpush1.msra.mxu0 0.0
    %486 = vmatprep.subr.mxu0 0.0
    %487 = vmatpush1.msra.mxu0 0.0
    %488 = vmatprep.subr.mxu0 0.0
    %489 = vmatpush1.msra.mxu0 0.0
    %490 = vmatprep.subr.mxu0 0.0
    %491 = vmatpush1.msra.mxu0 0.0
    %492 = vmatprep.subr.mxu0 0.0
    %493 = vmatpush1.msra.mxu0 0.0
    %494 = vmatprep.subr.mxu0 0.0
    %495 = vmatpush1.msra.mxu0 0.0
    %496 = vmatprep.subr.mxu0 0.0
    %497 = vmatpush1.msra.mxu0 0.0
    %498 = vmatprep.mubr.f32.mxu0 0.0
    %499 = vmatmul.mubr.f32.gmra.mrb[0].mxu0 %v410
    %v500 = vpop.f32.mrb[0].mxu0
    %v501 = vadd.f32 %v432, %v500
    %v502 = vpop.f32.mrb[0].mxu0
    %503 = vdwg.mxu0
    %v504 = vtanh.pop %v501
    %505 = vst [vmem:[#allocation10] sm:$0xff] %v504
    // Predicated region
    $region46: #{tpu_custom_call.1} parent=1 // pred_check
      _
    $region47: #{tpu_custom_call.1} parent=1 // pred_check_branch
      %507 = sbr.rel (0) target = $region49
    $region48: #{tpu_custom_call.1} parent=1 // pred_region
      %s509 = ssub.s32 128, 128
      %510 = vsyncadd [#allocation4], %s509
      %s512 = sshll.u32 [#allocation10], 4
      %s513 = int_to_ptr.vmem [resolvable:$true] %s512
      %515 = dma.vmem_to_hbm [thread:$0]  %s513, 128, %s7, [#allocation4]
    $region49: #{tpu_custom_call.1} parent=1 // pred_fallthru
      _
    // Predicated region
    $region50: #{tpu_custom_call.1} parent=1 // pred_check
      _
    $region51: #{tpu_custom_call.1} parent=1 // pred_check_branch
      %517 = sbr.rel (0) target = $region53
    $region52: #{tpu_custom_call.1} parent=1 // pred_region
      %518 = dma.done [#allocation4], 128
    $region53: #{tpu_custom_call.1} parent=1 // pred_fallthru
      _
    %519 = vsyncpa [#allocation3], 1
    %520 = vsyncpa [#allocation6], 1
    %521 = vsyncpa [#allocation9], 1
    %522 = vsyncpa [#allocation4], 1

</llo_original>
